<compile_context>
chip_gen: v6e
topology: v6e:2x2x1
jax: 0.10.0
libtpu: 0.0.40
codegen_flags: <defaults>
</compile_context>

<pallas_src>
import jax
import jax.numpy as jnp
from jax.experimental import pallas as pl
from jax.experimental.pallas import tpu as pltpu

BETA_MIN = 0.1
BETA_MAX = 20.0

LANE = 128
SUBLANE = 8
B_BLK_MAX = 256   # batch rows per grid step (fits VMEM with huge margin, incl. v7x 64 MiB)


def _round_up(n, m):
    return (n + m - 1) // m * m


# ----------------------------------------------------------------------------
# Kernel: fused prior+likelihood MLP, scaled by VP-SDE g(t).
# ----------------------------------------------------------------------------
def _posterior_score_kernel(
    x_ref,    # [b_blk, D]
    y_ref,    # [b_blk, Dy]
    t_ref,    # [b_blk, 1]
    w1x_ref,  # [D,  2H]   fused first-layer weights (x rows)
    w1y_ref,  # [Dy, 2H]   fused first-layer weights (y rows; prior half = 0)
    w1t_ref,  # [1,  2H]   fused first-layer weights (t row)
    b1_ref,   # [1,  2H]
    w2_ref,   # [2H, Dp]   vstack(w2p, w2l), zero-padded to Dp lanes
    b2_ref,   # [1,  Dp]   b2p + b2l, zero-padded
    out_ref,  # [b_blk, Dp]
):
    x = x_ref[...]
    y = y_ref[...]
    t = t_ref[...]

    # Fused first layer of both nets: columns 0:H -> prior hidden, H:2H -> likelihood hidden.
    pre = (
        jnp.dot(x, w1x_ref[...], preferred_element_type=jnp.float32)
        + jnp.dot(y, w1y_ref[...], preferred_element_type=jnp.float32)
        + t * w1t_ref[...]          # rank-1 "t column" of the concat matmul (VPU)
        + b1_ref[...]
    )
    h = jnp.tanh(pre)               # [b_blk, 2H]  (EUP)

    # Fused second layer: h @ [w2p; w2l] + (b2p + b2l)  ==  score_p + score_l.
    score = jnp.dot(h, w2_ref[...], preferred_element_type=jnp.float32) + b2_ref[...]

    # forward_sde.g(t, x): VP-SDE diffusion coefficient, broadcast over the feature lanes.
    g = jnp.sqrt(BETA_MIN + t * (BETA_MAX - BETA_MIN))   # [b_blk, 1]  (EUP sqrt)
    out_ref[...] = g * score


# ----------------------------------------------------------------------------
# Wrapper
# ----------------------------------------------------------------------------
def posterior_score(x, y, t, fused_params):
    """x: [B, D], y: [B, Dy], t: [B, 1], fused_params from fuse_params() -> [B, D]."""
    B, D = x.shape
    Dy = y.shape[-1]
    (w1x, w1y, w1t, b1, w2, b2) = fused_params
    H2 = w1x.shape[1]      # 2 * H (lane aligned: 256)
    Dp = w2.shape[1]       # D padded to a multiple of 128 (lane-dense output)

    # Batch tiling: blocks of up to B_BLK_MAX rows, padded to a sublane multiple.
    b_blk = min(B_BLK_MAX, _round_up(B, SUBLANE))
    b_pad = _round_up(B, b_blk)
    if b_pad != B:
        pad = ((0, b_pad - B), (0, 0))
        x = jnp.pad(x, pad)
        y = jnp.pad(y, pad)
        t = jnp.pad(t, pad)

    grid = (b_pad // b_blk,)

    cost = pl.CostEstimate(
        flops=2 * b_pad * H2 * (D + Dy + Dp),
        transcendentals=b_pad * (H2 + 1),                       # tanh + sqrt
        bytes_accessed=4 * (b_pad * (D + Dy + 1 + Dp)
                            + H2 * (D + Dy + 2) + H2 * Dp + Dp),
    )

    out = pl.pallas_call(
        _posterior_score_kernel,
        out_shape=jax.ShapeDtypeStruct((b_pad, Dp), jnp.float32),
        grid=grid,
        in_specs=[
            # batch-tiled activations
            pl.BlockSpec((b_blk, D), lambda i: (i, 0)),
            pl.BlockSpec((b_blk, Dy), lambda i: (i, 0)),
            pl.BlockSpec((b_blk, 1), lambda i: (i, 0)),
            # VMEM-resident weights (constant block index across grid steps)
            pl.BlockSpec((D, H2), lambda i: (0, 0)),
            pl.BlockSpec((Dy, H2), lambda i: (0, 0)),
            pl.BlockSpec((1, H2), lambda i: (0, 0)),
            pl.BlockSpec((1, H2), lambda i: (0, 0)),
            pl.BlockSpec((H2, Dp), lambda i: (0, 0)),
            pl.BlockSpec((1, Dp), lambda i: (0, 0)),
        ],
        out_specs=pl.BlockSpec((b_blk, Dp), lambda i: (i, 0)),
        compiler_params=pltpu.CompilerParams(
            dimension_semantics=("parallel",),   # shard batch blocks across TCs on v7x
        ),
        cost_estimate=cost,
    )(x, y, t, w1x, w1y, w1t, b1, w2, b2)

    return out[:B, :D]


# ----------------------------------------------------------------------------
# Synthetic nets: raw params (as the injected nn.Modules would hold them) and
# a one-time offline fusion into the lane-aligned packed form the kernel uses.
# ----------------------------------------------------------------------------
def init_params(key, D, Dy, H):
    ks = jax.random.split(key, 4)

    def dense(k, fan_in, fan_out):
        w = jax.random.normal(k, (fan_in, fan_out), jnp.float32) / jnp.sqrt(fan_in)
        b = jnp.zeros((1, fan_out), jnp.float32)
        return w, b

    w1p, b1p = dense(ks[0], D + 1, H)        # prior_net layer 1 on concat(x, t)
    w2p, b2p = dense(ks[1], H, D)            # prior_net layer 2
    w1l, b1l = dense(ks[2], D + Dy + 1, H)   # likelihood_net layer 1 on concat(x, y, t)
    w2l, b2l = dense(ks[3], H, D)            # likelihood_net layer 2
    return (w1p, b1p, w2p, b2p, w1l, b1l, w2l, b2l)


def fuse_params(params, D, Dy, H, d_pad):
    """Pack the two MLPs into fused, lane-aligned weights (done once, offline)."""
    (w1p, b1p, w2p, b2p, w1l, b1l, w2l, b2l) = params
    zeros_yp = jnp.zeros((Dy, H), jnp.float32)           # prior net never sees y

    w1x = jnp.concatenate([w1p[:D], w1l[:D]], axis=1)                        # [D,  2H]
    w1y = jnp.concatenate([zeros_yp, w1l[D:D + Dy]], axis=1)                 # [Dy, 2H]
    w1t = jnp.concatenate([w1p[D:D + 1], w1l[D + Dy:D + Dy + 1]], axis=1)    # [1,  2H]
    b1 = jnp.concatenate([b1p, b1l], axis=1)                                 # [1,  2H]
    w2 = jnp.concatenate([w2p, w2l], axis=0)                                 # [2H, D]
    b2 = b2p + b2l                                                           # [1,  D]

    # Pad output feature dim to a lane multiple -> unmasked, lane-dense stores.
    w2 = jnp.pad(w2, ((0, 0), (0, d_pad - D)))
    b2 = jnp.pad(b2, ((0, 0), (0, d_pad - D)))
    return (w1x, w1y, w1t, b1, w2, b2)


def _reference(x, y, t, params):
    """Pure-JAX reference of the original (unfused) forward pass."""
    (w1p, b1p, w2p, b2p, w1l, b1l, w2l, b2l) = params
    xt = jnp.concatenate([x, t], axis=-1)
    xyt = jnp.concatenate([x, y, t], axis=-1)
    score_p = jnp.tanh(xt @ w1p + b1p) @ w2p + b2p
    score_l = jnp.tanh(xyt @ w1l + b1l) @ w2l + b2l
    g = jnp.sqrt(BETA_MIN + t * (BETA_MAX - BETA_MIN))
    return g * (score_p + score_l)


if __name__ == "__main__":
    # Small test shapes; H = 128 so the fused hidden width 2H = 256 is MXU-native.
    B, D, Dy, H = 64, 32, 16, 128

    key = jax.random.PRNGKey(0)
    kx, ky, kt, kp = jax.random.split(key, 4)

    x = jax.random.normal(kx, (B, D), jnp.float32)
    y = jax.random.normal(ky, (B, Dy), jnp.float32)
    t = jax.random.uniform(kt, (B, 1), jnp.float32, minval=1e-3, maxval=1.0)

    params = init_params(kp, D, Dy, H)
    fused = fuse_params(params, D, Dy, H, d_pad=_round_up(D, LANE))

    run = jax.jit(posterior_score)
    out = run(x, y, t, fused)
    jax.block_until_ready(out)

    ref = _reference(x, y, t, params)
    assert out.shape == (B, D)
    assert jnp.allclose(out, ref, atol=1e-4, rtol=1e-4), "mismatch vs reference"

    print("KERNEL_OK")
</pallas_src>

<mosaic_0001>
module attributes {stable_mosaic.version = 11 : i64} {
  func.func @_posterior_score_kernel(%arg0: i32, %arg1: memref<64x32xf32, #tpu.memory_space<vmem>>, %arg2: memref<64x16xf32, #tpu.memory_space<vmem>>, %arg3: memref<64x1xf32, #tpu.memory_space<vmem>>, %arg4: memref<32x256xf32, #tpu.memory_space<vmem>>, %arg5: memref<16x256xf32, #tpu.memory_space<vmem>>, %arg6: memref<1x256xf32, #tpu.memory_space<vmem>>, %arg7: memref<1x256xf32, #tpu.memory_space<vmem>>, %arg8: memref<256x128xf32, #tpu.memory_space<vmem>>, %arg9: memref<1x128xf32, #tpu.memory_space<vmem>>, %arg10: memref<64x128xf32, #tpu.memory_space<vmem>>) attributes {dimension_semantics = [#tpu.dimension_semantics<parallel>], iteration_bounds = array<i64: 1>, scalar_prefetch = 0 : i64, scratch_operands = 0 : i64, tpu.core_type = #tpu.core_type<tc>, window_params = [{transform_indices = @transform_0, window_bounds = array<i64: 64, 32>}, {transform_indices = @transform_1, window_bounds = array<i64: 64, 16>}, {transform_indices = @transform_2, window_bounds = array<i64: 64, 1>}, {pipeline_mode = #tpu.pipeline_mode<synchronous>, transform_indices = @transform_3, window_bounds = array<i64: 32, 256>}, {pipeline_mode = #tpu.pipeline_mode<synchronous>, transform_indices = @transform_4, window_bounds = array<i64: 16, 256>}, {pipeline_mode = #tpu.pipeline_mode<synchronous>, transform_indices = @transform_5, window_bounds = array<i64: 1, 256>}, {pipeline_mode = #tpu.pipeline_mode<synchronous>, transform_indices = @transform_6, window_bounds = array<i64: 1, 256>}, {pipeline_mode = #tpu.pipeline_mode<synchronous>, transform_indices = @transform_7, window_bounds = array<i64: 256, 128>}, {pipeline_mode = #tpu.pipeline_mode<synchronous>, transform_indices = @transform_8, window_bounds = array<i64: 1, 128>}, {transform_indices = @transform_9, window_bounds = array<i64: 64, 128>}]} {
    %c0 = arith.constant 0 : index
    %c0_0 = arith.constant 0 : index
    %0 = vector.load %arg1[%c0, %c0_0] : memref<64x32xf32, #tpu.memory_space<vmem>>, vector<64x32xf32>
    %c0_1 = arith.constant 0 : index
    %c0_2 = arith.constant 0 : index
    %1 = vector.load %arg2[%c0_1, %c0_2] : memref<64x16xf32, #tpu.memory_space<vmem>>, vector<64x16xf32>
    %c0_3 = arith.constant 0 : index
    %c0_4 = arith.constant 0 : index
    %2 = vector.load %arg3[%c0_3, %c0_4] : memref<64x1xf32, #tpu.memory_space<vmem>>, vector<64x1xf32>
    %c0_5 = arith.constant 0 : index
    %c0_6 = arith.constant 0 : index
    %3 = vector.load %arg4[%c0_5, %c0_6] : memref<32x256xf32, #tpu.memory_space<vmem>>, vector<32x256xf32>
    %cst = arith.constant dense<0.000000e+00> : vector<64x256xf32>
    %4 = tpu.matmul %0, %3, %cst {dimension_numbers = #tpu.dot_dimension_numbers<[1], [0], [0], [1], [0, 0, 1, 1], [], []>} : vector<64x32xf32>, vector<32x256xf32>, vector<64x256xf32> -> vector<64x256xf32>
    %c0_7 = arith.constant 0 : index
    %c0_8 = arith.constant 0 : index
    %5 = vector.load %arg5[%c0_7, %c0_8] : memref<16x256xf32, #tpu.memory_space<vmem>>, vector<16x256xf32>
    %cst_9 = arith.constant dense<0.000000e+00> : vector<64x256xf32>
    %6 = tpu.matmul %1, %5, %cst_9 {dimension_numbers = #tpu.dot_dimension_numbers<[1], [0], [0], [1], [0, 0, 1, 1], [], []>} : vector<64x16xf32>, vector<16x256xf32>, vector<64x256xf32> -> vector<64x256xf32>
    %7 = arith.addf %4, %6 : vector<64x256xf32>
    %c0_10 = arith.constant 0 : index
    %c0_11 = arith.constant 0 : index
    %8 = vector.load %arg6[%c0_10, %c0_11] : memref<1x256xf32, #tpu.memory_space<vmem>>, vector<1x256xf32>
    %9 = vector.broadcast %2 : vector<64x1xf32> to vector<64x256xf32>
    %10 = vector.broadcast %8 : vector<1x256xf32> to vector<64x256xf32>
    %11 = arith.mulf %9, %10 : vector<64x256xf32>
    %12 = arith.addf %7, %11 : vector<64x256xf32>
    %c0_12 = arith.constant 0 : index
    %c0_13 = arith.constant 0 : index
    %13 = vector.load %arg7[%c0_12, %c0_13] : memref<1x256xf32, #tpu.memory_space<vmem>>, vector<1x256xf32>
    %14 = vector.broadcast %13 : vector<1x256xf32> to vector<64x256xf32>
    %15 = arith.addf %12, %14 : vector<64x256xf32>
    %16 = math.tanh %15 : vector<64x256xf32>
    %c0_14 = arith.constant 0 : index
    %c0_15 = arith.constant 0 : index
    %17 = vector.load %arg8[%c0_14, %c0_15] : memref<256x128xf32, #tpu.memory_space<vmem>>, vector<256x128xf32>
    %cst_16 = arith.constant dense<0.000000e+00> : vector<64x128xf32>
    %18 = tpu.matmul %16, %17, %cst_16 {dimension_numbers = #tpu.dot_dimension_numbers<[1], [0], [0], [1], [0, 0, 1, 1], [], []>} : vector<64x256xf32>, vector<256x128xf32>, vector<64x128xf32> -> vector<64x128xf32>
    %c0_17 = arith.constant 0 : index
    %c0_18 = arith.constant 0 : index
    %19 = vector.load %arg9[%c0_17, %c0_18] : memref<1x128xf32, #tpu.memory_space<vmem>>, vector<1x128xf32>
    %20 = vector.broadcast %19 : vector<1x128xf32> to vector<64x128xf32>
    %21 = arith.addf %18, %20 : vector<64x128xf32>
    %cst_19 = arith.constant 1.990000e+01 : f32
    %22 = vector.broadcast %cst_19 : f32 to vector<64x1xf32>
    %23 = arith.mulf %2, %22 : vector<64x1xf32>
    %cst_20 = arith.constant 1.000000e-01 : f32
    %24 = vector.broadcast %cst_20 : f32 to vector<64x1xf32>
    %25 = arith.addf %24, %23 : vector<64x1xf32>
    %26 = math.sqrt %25 : vector<64x1xf32>
    %27 = vector.broadcast %26 : vector<64x1xf32> to vector<64x128xf32>
    %28 = arith.mulf %27, %21 : vector<64x128xf32>
    %c0_21 = arith.constant 0 : index
    %c0_22 = arith.constant 0 : index
    %29 = vector.load %arg10[%c0_21, %c0_22] : memref<64x128xf32, #tpu.memory_space<vmem>>, vector<64x128xf32>
    tpu.vector_store %arg10[%c0_21, %c0_22], %28 {strides = array<i32>} : memref<64x128xf32, #tpu.memory_space<vmem>>, vector<64x128xf32>,
    return
  }
  func.func @transform_0(%arg0: i32) -> (i32, i32) {
    %c0_i32 = arith.constant 0 : i32
    %c0_i32_0 = arith.constant 0 : i32
    return %arg0, %c0_i32 : i32, i32
  }
  func.func @transform_1(%arg0: i32) -> (i32, i32) {
    %c0_i32 = arith.constant 0 : i32
    %c0_i32_0 = arith.constant 0 : i32
    return %arg0, %c0_i32 : i32, i32
  }
  func.func @transform_2(%arg0: i32) -> (i32, i32) {
    %c0_i32 = arith.constant 0 : i32
    %c0_i32_0 = arith.constant 0 : i32
    return %arg0, %c0_i32 : i32, i32
  }
  func.func @transform_3(%arg0: i32) -> (i32, i32) {
    %c0_i32 = arith.constant 0 : i32
    %c0_i32_0 = arith.constant 0 : i32
    %c0_i32_1 = arith.constant 0 : i32
    return %c0_i32, %c0_i32_0 : i32, i32
  }
  func.func @transform_4(%arg0: i32) -> (i32, i32) {
    %c0_i32 = arith.constant 0 : i32
    %c0_i32_0 = arith.constant 0 : i32
    %c0_i32_1 = arith.constant 0 : i32
    return %c0_i32, %c0_i32_0 : i32, i32
  }
  func.func @transform_5(%arg0: i32) -> (i32, i32) {
    %c0_i32 = arith.constant 0 : i32
    %c0_i32_0 = arith.constant 0 : i32
    %c0_i32_1 = arith.constant 0 : i32
    return %c0_i32, %c0_i32_0 : i32, i32
  }
  func.func @transform_6(%arg0: i32) -> (i32, i32) {
    %c0_i32 = arith.constant 0 : i32
    %c0_i32_0 = arith.constant 0 : i32
    %c0_i32_1 = arith.constant 0 : i32
    return %c0_i32, %c0_i32_0 : i32, i32
  }
  func.func @transform_7(%arg0: i32) -> (i32, i32) {
    %c0_i32 = arith.constant 0 : i32
    %c0_i32_0 = arith.constant 0 : i32
    %c0_i32_1 = arith.constant 0 : i32
    return %c0_i32, %c0_i32_0 : i32, i32
  }
  func.func @transform_8(%arg0: i32) -> (i32, i32) {
    %c0_i32 = arith.constant 0 : i32
    %c0_i32_0 = arith.constant 0 : i32
    %c0_i32_1 = arith.constant 0 : i32
    return %c0_i32, %c0_i32_0 : i32, i32
  }
  func.func @transform_9(%arg0: i32) -> (i32, i32) {
    %c0_i32 = arith.constant 0 : i32
    %c0_i32_0 = arith.constant 0 : i32
    return %arg0, %c0_i32 : i32, i32
  }
}

</mosaic_0001>

<llo_original>
// kernel: posterior_score.1
$region0: #{posterior_score.1}
  #allocation0 [shape = 'u32[]', space=smem, size = 0x4, offset = 0x4, fixed_abs, tag = 'smem constant byte address 0x4 - core index']
  #allocation1 [shape = 'u32[144,128]{1,0:T(1,128)}', space=vmem, size = 0x12000, scoped, tag = 'internal scratch']
  %s0 = inlined_call_operand.vmem [shape: f32[64,32], index: 0, kind: input, shape index: {}]
  %s1 = inlined_call_operand.vmem [shape: f32[64,16], index: 1, kind: input, shape index: {}]
  %s2 = inlined_call_operand.vmem [shape: f32[64,1], index: 2, kind: input, shape index: {}]
  %s3 = inlined_call_operand.vmem [shape: f32[32,256], index: 3, kind: input, shape index: {}]
  %s4 = inlined_call_operand.vmem [shape: f32[16,256], index: 4, kind: input, shape index: {}]
  %s5 = inlined_call_operand.vmem [shape: f32[1,256], index: 5, kind: input, shape index: {}]
  %s6 = inlined_call_operand.vmem [shape: f32[1,256], index: 6, kind: input, shape index: {}]
  %s7 = inlined_call_operand.hbm [shape: f32[256,128], index: 7, kind: input, shape index: {}]
  %s8 = inlined_call_operand.vmem [shape: f32[1,128], index: 8, kind: input, shape index: {}]
  %s9 = inlined_call_operand.vmem [shape: f32[64,128], index: 9, kind: output, shape index: {}]
  %s10 = sld [smem:[#allocation0]]
  $region50: #{posterior_score.1} parent=0
    _
  %s12 = ssub.s32 1, %s10
  %s13 = scalar_select 0, %s12, %s10
  $region1: #{posterior_score.1} parent=0
    #allocation2 [shape = 'u8[131072]{0}', space=vmem, size = 0x20000, scoped, tag = 'input window, operand 7, single buffered']
    #allocation3 [shape = 's32[1]{0}', space=sflag, size = 0x4, scoped, tag = 'scoped memory for posterior_score.1']
    %14 = vsyncpa [#allocation3], 0
    // Predicated region
    $region2: #{posterior_score.1} parent=1 // pred_check
      _
    $region3: #{posterior_score.1} parent=1 // pred_check_branch
      %16 = sbr.rel (0) target = $region5
    $region4: #{posterior_score.1} parent=1 // pred_region
      _
    $region5: #{posterior_score.1} parent=1 // pred_fallthru
      _
    // Predicated region
    $region6: #{posterior_score.1} parent=1 // pred_check
      _
    $region7: #{posterior_score.1} parent=1 // pred_check_branch
      %18 = sbr.rel (0) target = $region9
    $region8: #{posterior_score.1} parent=1 // pred_region
      _
    $region9: #{posterior_score.1} parent=1 // pred_fallthru
      _
    // Predicated region
    $region10: #{posterior_score.1} parent=1 // pred_check
      _
    $region11: #{posterior_score.1} parent=1 // pred_check_branch
      %20 = sbr.rel (0) target = $region13
    $region12: #{posterior_score.1} parent=1 // pred_region
      _
    $region13: #{posterior_score.1} parent=1 // pred_fallthru
      _
    // Predicated region
    $region14: #{posterior_score.1} parent=1 // pred_check
      _
    $region15: #{posterior_score.1} parent=1 // pred_check_branch
      %22 = sbr.rel (0) target = $region17
    $region16: #{posterior_score.1} parent=1 // pred_region
      _
    $region17: #{posterior_score.1} parent=1 // pred_fallthru
      _
    // Predicated region
    $region18: #{posterior_score.1} parent=1 // pred_check
      _
    $region19: #{posterior_score.1} parent=1 // pred_check_branch
      %24 = sbr.rel (0) target = $region21
    $region20: #{posterior_score.1} parent=1 // pred_region
      _
    $region21: #{posterior_score.1} parent=1 // pred_fallthru
      _
    // Predicated region
    $region22: #{posterior_score.1} parent=1 // pred_check
      _
    $region23: #{posterior_score.1} parent=1 // pred_check_branch
      %26 = sbr.rel (0) target = $region25
    $region24: #{posterior_score.1} parent=1 // pred_region
      _
    $region25: #{posterior_score.1} parent=1 // pred_fallthru
      _
    // Predicated region
    $region26: #{posterior_score.1} parent=1 // pred_check
      _
    $region27: #{posterior_score.1} parent=1 // pred_check_branch
      %28 = sbr.rel (0) target = $region29
    $region28: #{posterior_score.1} parent=1 // pred_region
      _
    $region29: #{posterior_score.1} parent=1 // pred_fallthru
      _
    // Predicated region
    $region30: #{posterior_score.1} parent=1 // pred_check
      _
    $region31: #{posterior_score.1} parent=1 // pred_check_branch
      %30 = sbr.rel (0) target = $region33
    $region32: #{posterior_score.1} parent=1 // pred_region
      %s32 = ssub.s32 4096, 4096
      %33 = vsyncadd [#allocation3], %s32
      %s34 = sshll.u32 [#allocation2], 4
      %s35 = int_to_ptr.vmem [resolvable:$true] %s34
      %40 = dma.hbm_to_vmem [thread:$0]  %s7, 4096, %s35, [#allocation3], 128, 128, 8
    $region33: #{posterior_score.1} parent=1 // pred_fallthru
      _
    // Predicated region
    $region34: #{posterior_score.1} parent=1 // pred_check
      _
    $region35: #{posterior_score.1} parent=1 // pred_check_branch
      %42 = sbr.rel (0) target = $region37
    $region36: #{posterior_score.1} parent=1 // pred_region
      _
    $region37: #{posterior_score.1} parent=1 // pred_fallthru
      _
    // Predicated region
    $region38: #{posterior_score.1} parent=1 // pred_check
      _
    $region39: #{posterior_score.1} parent=1 // pred_check_branch
      %44 = sbr.rel (0) target = $region41
    $region40: #{posterior_score.1} parent=1 // pred_region
      %45 = dma.done [#allocation3], 4096
    $region41: #{posterior_score.1} parent=1 // pred_fallthru
      _
    %v46 = vld [vmem:[%s0] sm:$0xff]
    %v47 = vld [vmem:[%s0 + $0x8] sm:$0xff]
    %v48 = vld [vmem:[%s0 + $0x10] sm:$0xff]
    %v49 = vld [vmem:[%s0 + $0x18] sm:$0xff]
    %v50 = vld [vmem:[%s0 + $0x20] sm:$0xff]
    %v51 = vld [vmem:[%s0 + $0x28] sm:$0xff]
    %v52 = vld [vmem:[%s0 + $0x30] sm:$0xff]
    %v53 = vld [vmem:[%s0 + $0x38] sm:$0xff]
    %v54 = vld [vmem:[%s1] sm:$0xff]
    %v55 = vld [vmem:[%s1 + $0x8] sm:$0xff]
    %v56 = vld [vmem:[%s1 + $0x10] sm:$0xff]
    %v57 = vld [vmem:[%s1 + $0x18] sm:$0xff]
    %v58 = vld [vmem:[%s1 + $0x20] sm:$0xff]
    %v59 = vld [vmem:[%s1 + $0x28] sm:$0xff]
    %v60 = vld [vmem:[%s1 + $0x30] sm:$0xff]
    %v61 = vld [vmem:[%s1 + $0x38] sm:$0xff]
    %v62 = vld [vmem:[%s2] sm:$0xff]
    %v63 = vld [vmem:[%s2 + $0x8] sm:$0xff]
    %v64 = vld [vmem:[%s2 + $0x10] sm:$0xff]
    %v65 = vld [vmem:[%s2 + $0x18] sm:$0xff]
    %v66 = vld [vmem:[%s2 + $0x20] sm:$0xff]
    %v67 = vld [vmem:[%s2 + $0x28] sm:$0xff]
    %v68 = vld [vmem:[%s2 + $0x30] sm:$0xff]
    %v69 = vld [vmem:[%s2 + $0x38] sm:$0xff]
    %v70 = vld [vmem:[%s3] sm:$0xff]
    %v71 = vld [vmem:[%s3 + $0x8] sm:$0xff]
    %v72 = vld [vmem:[%s3 + $0x10] sm:$0xff]
    %v73 = vld [vmem:[%s3 + $0x18] sm:$0xff]
    %v74 = vld [vmem:[%s3 + $0x20] sm:$0xff]
    %v75 = vld [vmem:[%s3 + $0x28] sm:$0xff]
    %v76 = vld [vmem:[%s3 + $0x30] sm:$0xff]
    %v77 = vld [vmem:[%s3 + $0x38] sm:$0xff]
    %v78 = vld [vmem:[%s4] sm:$0xff]
    %v79 = vld [vmem:[%s4 + $0x8] sm:$0xff]
    %v80 = vld [vmem:[%s4 + $0x10] sm:$0xff]
    %v81 = vld [vmem:[%s4 + $0x18] sm:$0xff]
    %vm82 = vcmask 130048
    %v84 = vsel %vm82, %v54, 0
    %v87 = vsel %vm82, %v55, 0
    %v90 = vsel %vm82, %v56, 0
    %v93 = vsel %vm82, %v57, 0
    %v96 = vsel %vm82, %v58, 0
    %v99 = vsel %vm82, %v59, 0
    %v102 = vsel %vm82, %v60, 0
    %v105 = vsel %vm82, %v61, 0
    %107 = vmatprep.subr.mxu0 0.0
    %108 = vmatpush1.msra.mxu0 0.0
    %109 = vmatprep.subr.mxu0 0.0
    %110 = vmatpush1.msra.mxu0 0.0
    %111 = vmatprep.subr.mxu0 0.0
    %112 = vmatpush1.msra.mxu0 0.0
    %113 = vmatprep.subr.mxu0 0.0
    %114 = vmatpush1.msra.mxu0 0.0
    %115 = vmatprep.subr.mxu0 0.0
    %116 = vmatpush1.msra.mxu0 0.0
    %117 = vmatprep.subr.mxu0 0.0
    %118 = vmatpush1.msra.mxu0 0.0
    %119 = vmatprep.subr.mxu0 0.0
    %120 = vmatpush1.msra.mxu0 0.0
    %121 = vmatprep.subr.mxu0 0.0
    %122 = vmatpush1.msra.mxu0 0.0
    %123 = vmatprep.subr.mxu0 0.0
    %124 = vmatpush1.msra.mxu0 0.0
    %125 = vmatprep.subr.mxu0 0.0
    %126 = vmatpush1.msra.mxu0 0.0
    %127 = vmatprep.subr.mxu0 0.0
    %128 = vmatpush1.msra.mxu0 0.0
    %129 = vmatprep.subr.mxu0 0.0
    %130 = vmatpush1.msra.mxu0 0.0
    %131 = vmatprep.subr.mxu0 0.0
    %132 = vmatpush1.msra.mxu0 0.0
    %133 = vmatprep.subr.mxu0 0.0
    %134 = vmatpush1.msra.mxu0 0.0
    %135 = vmatprep.subr.mxu0 %v81
    %136 = vmatpush1.msra.mxu0 %v80
    %137 = vmatprep.subr.mxu0 %v79
    %138 = vmatpush1.msra.mxu0 %v78
    %139 = vmatprep.subr.mxu0 0.0
    %140 = vmatpush2.msra.mxu0 0.0
    %141 = vmatprep.subr.mxu0 0.0
    %142 = vmatpush2.msra.mxu0 0.0
    %143 = vmatprep.subr.mxu0 0.0
    %144 = vmatpush2.msra.mxu0 0.0
    %145 = vmatprep.subr.mxu0 0.0
    %146 = vmatpush2.msra.mxu0 0.0
    %147 = vmatprep.subr.mxu0 0.0
    %148 = vmatpush2.msra.mxu0 0.0
    %149 = vmatprep.subr.mxu0 0.0
    %150 = vmatpush2.msra.mxu0 0.0
    %151 = vmatprep.subr.mxu0 0.0
    %152 = vmatpush2.msra.mxu0 0.0
    %153 = vmatprep.subr.mxu0 0.0
    %154 = vmatpush2.msra.mxu0 0.0
    %155 = vmatprep.subr.mxu0 0.0
    %156 = vmatpush2.msra.mxu0 0.0
    %157 = vmatprep.subr.mxu0 0.0
    %158 = vmatpush2.msra.mxu0 0.0
    %159 = vmatprep.subr.mxu0 0.0
    %160 = vmatpush2.msra.mxu0 0.0
    %161 = vmatprep.subr.mxu0 0.0
    %162 = vmatpush2.msra.mxu0 0.0
    %163 = vmatprep.subr.mxu0 0.0
    %164 = vmatpush2.msra.mxu0 0.0
    %165 = vmatprep.subr.mxu0 0.0
    %166 = vmatpush2.msra.mxu0 0.0
    %167 = vmatprep.subr.mxu0 0.0
    %168 = vmatpush2.msra.mxu0 0.0
    %169 = vmatprep.subr.mxu0 0.0
    %170 = vmatpush2.msra.mxu0 0.0
    %171 = vmatprep.mubr.f32.mxu0 0.0
    %172 = vmatmul.mubr.f32.gmra.mxu0 %v84
    %v173 = vpop.f32.mrf.mxu0
    %v174 = vadd.f32 0.0, %v173
    %v175 = vpop.f32.mrf.mxu0
    %v176 = vadd.f32 0.0, %v175
    %177 = vmatprep.mubr.f32.mxu0 0.0
    %178 = vmatmul.mubr.f32.gmra.mxu0 %v87
    %v179 = vpop.f32.mrf.mxu0
    %v180 = vadd.f32 0.0, %v179
    %v181 = vpop.f32.mrf.mxu0
    %v182 = vadd.f32 0.0, %v181
    %183 = vmatprep.mubr.f32.mxu0 0.0
    %184 = vmatmul.mubr.f32.gmra.mxu0 %v90
    %v185 = vpop.f32.mrf.mxu0
    %v186 = vadd.f32 0.0, %v185
    %v187 = vpop.f32.mrf.mxu0
    %v188 = vadd.f32 0.0, %v187
    %189 = vmatprep.mubr.f32.mxu0 0.0
    %190 = vmatmul.mubr.f32.gmra.mxu0 %v93
    %v191 = vpop.f32.mrf.mxu0
    %v192 = vadd.f32 0.0, %v191
    %v193 = vpop.f32.mrf.mxu0
    %v194 = vadd.f32 0.0, %v193
    %195 = vmatprep.mubr.f32.mxu0 0.0
    %196 = vmatmul.mubr.f32.gmra.mxu0 %v96
    %v197 = vpop.f32.mrf.mxu0
    %v198 = vadd.f32 0.0, %v197
    %v199 = vpop.f32.mrf.mxu0
    %v200 = vadd.f32 0.0, %v199
    %201 = vmatprep.mubr.f32.mxu0 0.0
    %202 = vmatmul.mubr.f32.gmra.mxu0 %v99
    %v203 = vpop.f32.mrf.mxu0
    %v204 = vadd.f32 0.0, %v203
    %v205 = vpop.f32.mrf.mxu0
    %v206 = vadd.f32 0.0, %v205
    %207 = vmatprep.mubr.f32.mxu0 0.0
    %208 = vmatmul.mubr.f32.gmra.mxu0 %v102
    %v209 = vpop.f32.mrf.mxu0
    %v210 = vadd.f32 0.0, %v209
    %v211 = vpop.f32.mrf.mxu0
    %v212 = vadd.f32 0.0, %v211
    %213 = vmatprep.mubr.f32.mxu0 0.0
    %214 = vmatmul.mubr.f32.gmra.mxu0 %v105
    %v215 = vpop.f32.mrf.mxu0
    %v216 = vadd.f32 0.0, %v215
    %v217 = vpop.f32.mrf.mxu0
    %v218 = vadd.f32 0.0, %v217
    %219 = vdwg.mxu0
    %vm220 = vcmask 261120
    %v222 = vsel %vm220, %v46, 0
    %v225 = vsel %vm220, %v47, 0
    %v228 = vsel %vm220, %v48, 0
    %v231 = vsel %vm220, %v49, 0
    %v234 = vsel %vm220, %v50, 0
    %v237 = vsel %vm220, %v51, 0
    %v240 = vsel %vm220, %v52, 0
    %v243 = vsel %vm220, %v53, 0
    %245 = vmatprep.subr.mxu0 0.0
    %246 = vmatpush1.msra.mxu0 0.0
    %247 = vmatprep.subr.mxu0 0.0
    %248 = vmatpush1.msra.mxu0 0.0
    %249 = vmatprep.subr.mxu0 0.0
    %250 = vmatpush1.msra.mxu0 0.0
    %251 = vmatprep.subr.mxu0 0.0
    %252 = vmatpush1.msra.mxu0 0.0
    %253 = vmatprep.subr.mxu0 0.0
    %254 = vmatpush1.msra.mxu0 0.0
    %255 = vmatprep.subr.mxu0 0.0
    %256 = vmatpush1.msra.mxu0 0.0
    %257 = vmatprep.subr.mxu0 0.0
    %258 = vmatpush1.msra.mxu0 0.0
    %259 = vmatprep.subr.mxu0 0.0
    %260 = vmatpush1.msra.mxu0 0.0
    %261 = vmatprep.subr.mxu0 0.0
    %262 = vmatpush1.msra.mxu0 0.0
    %263 = vmatprep.subr.mxu0 0.0
    %264 = vmatpush1.msra.mxu0 0.0
    %265 = vmatprep.subr.mxu0 0.0
    %266 = vmatpush1.msra.mxu0 0.0
    %267 = vmatprep.subr.mxu0 0.0
    %268 = vmatpush1.msra.mxu0 0.0
    %269 = vmatprep.subr.mxu0 %v77
    %270 = vmatpush1.msra.mxu0 %v76
    %271 = vmatprep.subr.mxu0 %v75
    %272 = vmatpush1.msra.mxu0 %v74
    %273 = vmatprep.subr.mxu0 %v73
    %274 = vmatpush1.msra.mxu0 %v72
    %275 = vmatprep.subr.mxu0 %v71
    %276 = vmatpush1.msra.mxu0 %v70
    %277 = vmatprep.subr.mxu0 0.0
    %278 = vmatpush2.msra.mxu0 0.0
    %279 = vmatprep.subr.mxu0 0.0
    %280 = vmatpush2.msra.mxu0 0.0
    %281 = vmatprep.subr.mxu0 0.0
    %282 = vmatpush2.msra.mxu0 0.0
    %283 = vmatprep.subr.mxu0 0.0
    %284 = vmatpush2.msra.mxu0 0.0
    %285 = vmatprep.subr.mxu0 0.0
    %286 = vmatpush2.msra.mxu0 0.0
    %287 = vmatprep.subr.mxu0 0.0
    %288 = vmatpush2.msra.mxu0 0.0
    %289 = vmatprep.subr.mxu0 0.0
    %290 = vmatpush2.msra.mxu0 0.0
    %291 = vmatprep.subr.mxu0 0.0
    %292 = vmatpush2.msra.mxu0 0.0
    %293 = vmatprep.subr.mxu0 0.0
    %294 = vmatpush2.msra.mxu0 0.0
    %295 = vmatprep.subr.mxu0 0.0
    %296 = vmatpush2.msra.mxu0 0.0
    %297 = vmatprep.subr.mxu0 0.0
    %298 = vmatpush2.msra.mxu0 0.0
    %299 = vmatprep.subr.mxu0 0.0
    %300 = vmatpush2.msra.mxu0 0.0
    %301 = vmatprep.subr.mxu0 0.0
    %302 = vmatpush2.msra.mxu0 0.0
    %303 = vmatprep.subr.mxu0 0.0
    %304 = vmatpush2.msra.mxu0 0.0
    %305 = vmatprep.subr.mxu0 0.0
    %306 = vmatpush2.msra.mxu0 0.0
    %307 = vmatprep.subr.mxu0 0.0
    %308 = vmatpush2.msra.mxu0 0.0
    %309 = vmatprep.mubr.f32.mxu0 0.0
    %310 = vmatmul.mubr.f32.gmra.mxu0 %v222
    %v311 = vpop.f32.mrf.mxu0
    %v312 = vadd.f32 %v174, %v311
    %v313 = vpop.f32.mrf.mxu0
    %v314 = vadd.f32 %v176, %v313
    %315 = vmatprep.mubr.f32.mxu0 0.0
    %316 = vmatmul.mubr.f32.gmra.mxu0 %v225
    %v317 = vpop.f32.mrf.mxu0
    %v318 = vadd.f32 %v180, %v317
    %v319 = vpop.f32.mrf.mxu0
    %v320 = vadd.f32 %v182, %v319
    %321 = vmatprep.mubr.f32.mxu0 0.0
    %322 = vmatmul.mubr.f32.gmra.mxu0 %v228
    %v323 = vpop.f32.mrf.mxu0
    %v324 = vadd.f32 %v186, %v323
    %v325 = vpop.f32.mrf.mxu0
    %v326 = vadd.f32 %v188, %v325
    %327 = vmatprep.mubr.f32.mxu0 0.0
    %328 = vmatmul.mubr.f32.gmra.mxu0 %v231
    %v329 = vpop.f32.mrf.mxu0
    %v330 = vadd.f32 %v192, %v329
    %v331 = vpop.f32.mrf.mxu0
    %v332 = vadd.f32 %v194, %v331
    %333 = vmatprep.mubr.f32.mxu0 0.0
    %334 = vmatmul.mubr.f32.gmra.mxu0 %v234
    %v335 = vpop.f32.mrf.mxu0
    %v336 = vadd.f32 %v198, %v335
    %v337 = vpop.f32.mrf.mxu0
    %v338 = vadd.f32 %v200, %v337
    %339 = vmatprep.mubr.f32.mxu0 0.0
    %340 = vmatmul.mubr.f32.gmra.mxu0 %v237
    %v341 = vpop.f32.mrf.mxu0
    %v342 = vadd.f32 %v204, %v341
    %v343 = vpop.f32.mrf.mxu0
    %v344 = vadd.f32 %v206, %v343
    %345 = vmatprep.mubr.f32.mxu0 0.0
    %346 = vmatmul.mubr.f32.gmra.mxu0 %v240
    %v347 = vpop.f32.mrf.mxu0
    %v348 = vadd.f32 %v210, %v347
    %v349 = vpop.f32.mrf.mxu0
    %v350 = vadd.f32 %v212, %v349
    %351 = vmatprep.mubr.f32.mxu0 0.0
    %352 = vmatmul.mubr.f32.gmra.mxu0 %v243
    %v353 = vpop.f32.mrf.mxu0
    %v354 = vadd.f32 %v216, %v353
    %v355 = vpop.f32.mrf.mxu0
    %v356 = vadd.f32 %v218, %v355
    %357 = vdwg.mxu0
    %v358 = vld [vmem:[%s5] sm:$0x3]
    %360 = vset.pattern.permute.xlu0 0
    %361 = vperm.xlu0 %360, %v62
    %v362 = vpop.permute.xlu0 %361
    %365 = vset.pattern.permute.xlu0 0
    %366 = vperm.xlu0 %365, %v63
    %v367 = vpop.permute.xlu0 %366
    %370 = vset.pattern.permute.xlu0 0
    %371 = vperm.xlu0 %370, %v64
    %v372 = vpop.permute.xlu0 %371
    %375 = vset.pattern.permute.xlu0 0
    %376 = vperm.xlu0 %375, %v65
    %v377 = vpop.permute.xlu0 %376
    %380 = vset.pattern.permute.xlu0 0
    %381 = vperm.xlu0 %380, %v66
    %v382 = vpop.permute.xlu0 %381
    %385 = vset.pattern.permute.xlu0 0
    %386 = vperm.xlu0 %385, %v67
    %v387 = vpop.permute.xlu0 %386
    %390 = vset.pattern.permute.xlu0 0
    %391 = vperm.xlu0 %390, %v68
    %v392 = vpop.permute.xlu0 %391
    %395 = vset.pattern.permute.xlu0 0
    %396 = vperm.xlu0 %395, %v69
    %v397 = vpop.permute.xlu0 %396
    %v400 = vlaneseq
    %v401 = vshrl.u32 %v400, 7
    %v402 = vsub.s32 0, %v401
    %v403 = vrot.slane %v358, %v402
    %v404 = vlaneseq
    %v405 = vshrl.u32 %v404, 7
    %v406 = vsub.s32 1, %v405
    %v407 = vrot.slane %v358, %v406
    %v410 = vmul.f32 %v362, %v403
    %v411 = vmul.f32 %v362, %v407
    %v412 = vmul.f32 %v367, %v403
    %v413 = vmul.f32 %v367, %v407
    %v414 = vmul.f32 %v372, %v403
    %v415 = vmul.f32 %v372, %v407
    %v416 = vmul.f32 %v377, %v403
    %v417 = vmul.f32 %v377, %v407
    %v418 = vmul.f32 %v382, %v403
    %v419 = vmul.f32 %v382, %v407
    %v420 = vmul.f32 %v387, %v403
    %v421 = vmul.f32 %v387, %v407
    %v422 = vmul.f32 %v392, %v403
    %v423 = vmul.f32 %v392, %v407
    %v424 = vmul.f32 %v397, %v403
    %v425 = vmul.f32 %v397, %v407
    %v426 = vadd.f32 %v312, %v410
    %v427 = vadd.f32 %v314, %v411
    %v428 = vadd.f32 %v318, %v412
    %v429 = vadd.f32 %v320, %v413
    %v430 = vadd.f32 %v324, %v414
    %v431 = vadd.f32 %v326, %v415
    %v432 = vadd.f32 %v330, %v416
    %v433 = vadd.f32 %v332, %v417
    %v434 = vadd.f32 %v336, %v418
    %v435 = vadd.f32 %v338, %v419
    %v436 = vadd.f32 %v342, %v420
    %v437 = vadd.f32 %v344, %v421
    %v438 = vadd.f32 %v348, %v422
    %v439 = vadd.f32 %v350, %v423
    %v440 = vadd.f32 %v354, %v424
    %v441 = vadd.f32 %v356, %v425
    %v442 = vld [vmem:[%s6] sm:$0x3]
    %v444 = vlaneseq
    %v445 = vshrl.u32 %v444, 7
    %v446 = vsub.s32 0, %v445
    %v447 = vrot.slane %v442, %v446
    %v448 = vlaneseq
    %v449 = vshrl.u32 %v448, 7
    %v450 = vsub.s32 1, %v449
    %v451 = vrot.slane %v442, %v450
    %v454 = vadd.f32 %v426, %v447
    %v455 = vadd.f32 %v427, %v451
    %v456 = vadd.f32 %v428, %v447
    %v457 = vadd.f32 %v429, %v451
    %v458 = vadd.f32 %v430, %v447
    %v459 = vadd.f32 %v431, %v451
    %v460 = vadd.f32 %v432, %v447
    %v461 = vadd.f32 %v433, %v451
    %v462 = vadd.f32 %v434, %v447
    %v463 = vadd.f32 %v435, %v451
    %v464 = vadd.f32 %v436, %v447
    %v465 = vadd.f32 %v437, %v451
    %v466 = vadd.f32 %v438, %v447
    %v467 = vadd.f32 %v439, %v451
    %v468 = vadd.f32 %v440, %v447
    %v469 = vadd.f32 %v441, %v451
    %v470 = vtanh.pop %v454
    %v471 = vtanh.pop %v455
    %v472 = vtanh.pop %v456
    %v473 = vtanh.pop %v457
    %v474 = vtanh.pop %v458
    %v475 = vtanh.pop %v459
    %v476 = vtanh.pop %v460
    %v477 = vtanh.pop %v461
    %v478 = vtanh.pop %v462
    %v479 = vtanh.pop %v463
    %v480 = vtanh.pop %v464
    %v481 = vtanh.pop %v465
    %v482 = vtanh.pop %v466
    %v483 = vtanh.pop %v467
    %v484 = vtanh.pop %v468
    %v485 = vtanh.pop %v469
    %v486 = vld [vmem:[#allocation2] sm:$0xff]
    %v487 = vld [vmem:[#allocation2 + $0x8] sm:$0xff]
    %v488 = vld [vmem:[#allocation2 + $0x10] sm:$0xff]
    %v489 = vld [vmem:[#allocation2 + $0x18] sm:$0xff]
    %v490 = vld [vmem:[#allocation2 + $0x20] sm:$0xff]
    %v491 = vld [vmem:[#allocation2 + $0x28] sm:$0xff]
    %v492 = vld [vmem:[#allocation2 + $0x30] sm:$0xff]
    %v493 = vld [vmem:[#allocation2 + $0x38] sm:$0xff]
    %v494 = vld [vmem:[#allocation2 + $0x40] sm:$0xff]
    %v495 = vld [vmem:[#allocation2 + $0x48] sm:$0xff]
    %v496 = vld [vmem:[#allocation2 + $0x50] sm:$0xff]
    %v497 = vld [vmem:[#allocation2 + $0x58] sm:$0xff]
    %v498 = vld [vmem:[#allocation2 + $0x60] sm:$0xff]
    %v499 = vld [vmem:[#allocation2 + $0x68] sm:$0xff]
    %v500 = vld [vmem:[#allocation2 + $0x70] sm:$0xff]
    %v501 = vld [vmem:[#allocation2 + $0x78] sm:$0xff]
    %v502 = vld [vmem:[#allocation2 + $0x80] sm:$0xff]
    %v503 = vld [vmem:[#allocation2 + $0x88] sm:$0xff]
    %v504 = vld [vmem:[#allocation2 + $0x90] sm:$0xff]
    %v505 = vld [vmem:[#allocation2 + $0x98] sm:$0xff]
    %v506 = vld [vmem:[#allocation2 + $0xa0] sm:$0xff]
    %v507 = vld [vmem:[#allocation2 + $0xa8] sm:$0xff]
    %v508 = vld [vmem:[#allocation2 + $0xb0] sm:$0xff]
    %v509 = vld [vmem:[#allocation2 + $0xb8] sm:$0xff]
    %v510 = vld [vmem:[#allocation2 + $0xc0] sm:$0xff]
    %v511 = vld [vmem:[#allocation2 + $0xc8] sm:$0xff]
    %v512 = vld [vmem:[#allocation2 + $0xd0] sm:$0xff]
    %v513 = vld [vmem:[#allocation2 + $0xd8] sm:$0xff]
    %v514 = vld [vmem:[#allocation2 + $0xe0] sm:$0xff]
    %v515 = vld [vmem:[#allocation2 + $0xe8] sm:$0xff]
    %v516 = vld [vmem:[#allocation2 + $0xf0] sm:$0xff]
    %v517 = vld [vmem:[#allocation2 + $0xf8] sm:$0xff]
    %v518 = vld [vmem:[%s8] sm:$0x1]
    %v520 = vlaneseq
    %v521 = vshrl.u32 %v520, 7
    %v522 = vsub.s32 0, %v521
    %v523 = vrot.slane %v518, %v522
    %525 = vmatprep.subr.mxu0 0.0
    %526 = vmatpush1.msra.mxu0 %v501
    %527 = vmatprep.subr.mxu0 0.0
    %528 = vmatpush1.msra.mxu0 %v500
    %529 = vmatprep.subr.mxu0 0.0
    %530 = vmatpush1.msra.mxu0 %v499
    %531 = vmatprep.subr.mxu0 0.0
    %532 = vmatpush1.msra.mxu0 %v498
    %533 = vmatprep.subr.mxu0 0.0
    %534 = vmatpush1.msra.mxu0 %v497
    %535 = vmatprep.subr.mxu0 0.0
    %536 = vmatpush1.msra.mxu0 %v496
    %537 = vmatprep.subr.mxu0 0.0
    %538 = vmatpush1.msra.mxu0 %v495
    %539 = vmatprep.subr.mxu0 0.0
    %540 = vmatpush1.msra.mxu0 %v494
    %541 = vmatprep.subr.mxu0 0.0
    %542 = vmatpush1.msra.mxu0 %v493
    %543 = vmatprep.subr.mxu0 0.0
    %544 = vmatpush1.msra.mxu0 %v492
    %545 = vmatprep.subr.mxu0 0.0
    %546 = vmatpush1.msra.mxu0 %v491
    %547 = vmatprep.subr.mxu0 0.0
    %548 = vmatpush1.msra.mxu0 %v490
    %549 = vmatprep.subr.mxu0 0.0
    %550 = vmatpush1.msra.mxu0 %v489
    %551 = vmatprep.subr.mxu0 0.0
    %552 = vmatpush1.msra.mxu0 %v488
    %553 = vmatprep.subr.mxu0 0.0
    %554 = vmatpush1.msra.mxu0 %v487
    %555 = vmatprep.subr.mxu0 0.0
    %556 = vmatpush1.msra.mxu0 %v486
    %557 = vmatprep.subr.mxu0 0.0
    %558 = vmatpush2.msra.mxu0 %v517
    %559 = vmatprep.subr.mxu0 0.0
    %560 = vmatpush2.msra.mxu0 %v516
    %561 = vmatprep.subr.mxu0 0.0
    %562 = vmatpush2.msra.mxu0 %v515
    %563 = vmatprep.subr.mxu0 0.0
    %564 = vmatpush2.msra.mxu0 %v514
    %565 = vmatprep.subr.mxu0 0.0
    %566 = vmatpush2.msra.mxu0 %v513
    %567 = vmatprep.subr.mxu0 0.0
    %568 = vmatpush2.msra.mxu0 %v512
    %569 = vmatprep.subr.mxu0 0.0
    %570 = vmatpush2.msra.mxu0 %v511
    %571 = vmatprep.subr.mxu0 0.0
    %572 = vmatpush2.msra.mxu0 %v510
    %573 = vmatprep.subr.mxu0 0.0
    %574 = vmatpush2.msra.mxu0 %v509
    %575 = vmatprep.subr.mxu0 0.0
    %576 = vmatpush2.msra.mxu0 %v508
    %577 = vmatprep.subr.mxu0 0.0
    %578 = vmatpush2.msra.mxu0 %v507
    %579 = vmatprep.subr.mxu0 0.0
    %580 = vmatpush2.msra.mxu0 %v506
    %581 = vmatprep.subr.mxu0 0.0
    %582 = vmatpush2.msra.mxu0 %v505
    %583 = vmatprep.subr.mxu0 0.0
    %584 = vmatpush2.msra.mxu0 %v504
    %585 = vmatprep.subr.mxu0 0.0
    %586 = vmatpush2.msra.mxu0 %v503
    %587 = vmatprep.subr.mxu0 0.0
    %588 = vmatpush2.msra.mxu0 %v502
    %589 = vmatprep.mubr.f32.mxu0 %v471
    %590 = vmatmul.mubr.f32.gmra.mxu0 %v470
    %v591 = vpop.f32.mrf.mxu0
    %v592 = vadd.f32 %v523, %v591
    %v593 = vpop.f32.mrf.mxu0
    %594 = vmatprep.mubr.f32.mxu0 %v473
    %595 = vmatmul.mubr.f32.gmra.mxu0 %v472
    %v596 = vpop.f32.mrf.mxu0
    %v597 = vadd.f32 %v523, %v596
    %v598 = vpop.f32.mrf.mxu0
    %599 = vmatprep.mubr.f32.mxu0 %v475
    %600 = vmatmul.mubr.f32.gmra.mxu0 %v474
    %v601 = vpop.f32.mrf.mxu0
    %v602 = vadd.f32 %v523, %v601
    %v603 = vpop.f32.mrf.mxu0
    %604 = vmatprep.mubr.f32.mxu0 %v477
    %605 = vmatmul.mubr.f32.gmra.mxu0 %v476
    %v606 = vpop.f32.mrf.mxu0
    %v607 = vadd.f32 %v523, %v606
    %v608 = vpop.f32.mrf.mxu0
    %609 = vmatprep.mubr.f32.mxu0 %v479
    %610 = vmatmul.mubr.f32.gmra.mxu0 %v478
    %v611 = vpop.f32.mrf.mxu0
    %v612 = vadd.f32 %v523, %v611
    %v613 = vpop.f32.mrf.mxu0
    %614 = vmatprep.mubr.f32.mxu0 %v481
    %615 = vmatmul.mubr.f32.gmra.mxu0 %v480
    %v616 = vpop.f32.mrf.mxu0
    %v617 = vadd.f32 %v523, %v616
    %v618 = vpop.f32.mrf.mxu0
    %619 = vmatprep.mubr.f32.mxu0 %v483
    %620 = vmatmul.mubr.f32.gmra.mxu0 %v482
    %v621 = vpop.f32.mrf.mxu0
    %v622 = vadd.f32 %v523, %v621
    %v623 = vpop.f32.mrf.mxu0
    %624 = vmatprep.mubr.f32.mxu0 %v485
    %625 = vmatmul.mubr.f32.gmra.mxu0 %v484
    %v626 = vpop.f32.mrf.mxu0
    %v627 = vadd.f32 %v523, %v626
    %v628 = vpop.f32.mrf.mxu0
    %629 = vdwg.mxu0
    %v630 = vmul.f32 %v62, 19.9
    %v631 = vmul.f32 %v63, 19.9
    %v632 = vmul.f32 %v64, 19.9
    %v633 = vmul.f32 %v65, 19.9
    %v634 = vmul.f32 %v66, 19.9
    %v635 = vmul.f32 %v67, 19.9
    %v636 = vmul.f32 %v68, 19.9
    %v637 = vmul.f32 %v69, 19.9
    %v638 = vadd.f32 %v630, 0.1
    %v639 = vadd.f32 %v631, 0.1
    %v640 = vadd.f32 %v632, 0.1
    %v641 = vadd.f32 %v633, 0.1
    %v642 = vadd.f32 %v634, 0.1
    %v643 = vadd.f32 %v635, 0.1
    %v644 = vadd.f32 %v636, 0.1
    %v645 = vadd.f32 %v637, 0.1
    %v646 = vrsqrt.pop %v638
    %v647 = vmul.f32 %v638, %v646
    %vm648 = vcmp.eq.f32.partialorder %v638, inf
    %v649 = vsel %vm648, %v638, %v647
    %vm650 = vcmp.eq.f32.partialorder %v638, 0.0
    %v651 = vand.u32 %v638, 2147483648
    %v652 = vsel %vm650, %v651, %v649
    %v653 = vrsqrt.pop %v639
    %v654 = vmul.f32 %v639, %v653
    %vm655 = vcmp.eq.f32.partialorder %v639, inf
    %v656 = vsel %vm655, %v639, %v654
    %vm657 = vcmp.eq.f32.partialorder %v639, 0.0
    %v658 = vand.u32 %v639, 2147483648
    %v659 = vsel %vm657, %v658, %v656
    %v660 = vrsqrt.pop %v640
    %v661 = vmul.f32 %v640, %v660
    %vm662 = vcmp.eq.f32.partialorder %v640, inf
    %v663 = vsel %vm662, %v640, %v661
    %vm664 = vcmp.eq.f32.partialorder %v640, 0.0
    %v665 = vand.u32 %v640, 2147483648
    %v666 = vsel %vm664, %v665, %v663
    %v667 = vrsqrt.pop %v641
    %v668 = vmul.f32 %v641, %v667
    %vm669 = vcmp.eq.f32.partialorder %v641, inf
    %v670 = vsel %vm669, %v641, %v668
    %vm671 = vcmp.eq.f32.partialorder %v641, 0.0
    %v672 = vand.u32 %v641, 2147483648
    %v673 = vsel %vm671, %v672, %v670
    %v674 = vrsqrt.pop %v642
    %v675 = vmul.f32 %v642, %v674
    %vm676 = vcmp.eq.f32.partialorder %v642, inf
    %v677 = vsel %vm676, %v642, %v675
    %vm678 = vcmp.eq.f32.partialorder %v642, 0.0
    %v679 = vand.u32 %v642, 2147483648
    %v680 = vsel %vm678, %v679, %v677
    %v681 = vrsqrt.pop %v643
    %v682 = vmul.f32 %v643, %v681
    %vm683 = vcmp.eq.f32.partialorder %v643, inf
    %v684 = vsel %vm683, %v643, %v682
    %vm685 = vcmp.eq.f32.partialorder %v643, 0.0
    %v686 = vand.u32 %v643, 2147483648
    %v687 = vsel %vm685, %v686, %v684
    %v688 = vrsqrt.pop %v644
    %v689 = vmul.f32 %v644, %v688
    %vm690 = vcmp.eq.f32.partialorder %v644, inf
    %v691 = vsel %vm690, %v644, %v689
    %vm692 = vcmp.eq.f32.partialorder %v644, 0.0
    %v693 = vand.u32 %v644, 2147483648
    %v694 = vsel %vm692, %v693, %v691
    %v695 = vrsqrt.pop %v645
    %v696 = vmul.f32 %v645, %v695
    %vm697 = vcmp.eq.f32.partialorder %v645, inf
    %v698 = vsel %vm697, %v645, %v696
    %vm699 = vcmp.eq.f32.partialorder %v645, 0.0
    %v700 = vand.u32 %v645, 2147483648
    %v701 = vsel %vm699, %v700, %v698
    %703 = vset.pattern.permute.xlu0 0
    %704 = vperm.xlu0 %703, %v652
    %v705 = vpop.permute.xlu0 %704
    %708 = vset.pattern.permute.xlu0 0
    %709 = vperm.xlu0 %708, %v659
    %v710 = vpop.permute.xlu0 %709
    %713 = vset.pattern.permute.xlu0 0
    %714 = vperm.xlu0 %713, %v666
    %v715 = vpop.permute.xlu0 %714
    %718 = vset.pattern.permute.xlu0 0
    %719 = vperm.xlu0 %718, %v673
    %v720 = vpop.permute.xlu0 %719
    %723 = vset.pattern.permute.xlu0 0
    %724 = vperm.xlu0 %723, %v680
    %v725 = vpop.permute.xlu0 %724
    %728 = vset.pattern.permute.xlu0 0
    %729 = vperm.xlu0 %728, %v687
    %v730 = vpop.permute.xlu0 %729
    %733 = vset.pattern.permute.xlu0 0
    %734 = vperm.xlu0 %733, %v694
    %v735 = vpop.permute.xlu0 %734
    %738 = vset.pattern.permute.xlu0 0
    %739 = vperm.xlu0 %738, %v701
    %v740 = vpop.permute.xlu0 %739
    %v742 = vmul.f32 %v705, %v592
    %v743 = vmul.f32 %v710, %v597
    %v744 = vmul.f32 %v715, %v602
    %v745 = vmul.f32 %v720, %v607
    %v746 = vmul.f32 %v725, %v612
    %v747 = vmul.f32 %v730, %v617
    %v748 = vmul.f32 %v735, %v622
    %v749 = vmul.f32 %v740, %v627
    %750 = vst [vmem:[%s9] sm:$0xff] %v742
    %751 = vst [vmem:[%s9 + $0x8] sm:$0xff] %v743
    %752 = vst [vmem:[%s9 + $0x10] sm:$0xff] %v744
    %753 = vst [vmem:[%s9 + $0x18] sm:$0xff] %v745
    %754 = vst [vmem:[%s9 + $0x20] sm:$0xff] %v746
    %755 = vst [vmem:[%s9 + $0x28] sm:$0xff] %v747
    %756 = vst [vmem:[%s9 + $0x30] sm:$0xff] %v748
    %757 = vst [vmem:[%s9 + $0x38] sm:$0xff] %v749
    // Predicated region
    $region42: #{posterior_score.1} parent=1 // pred_check
      _
    $region43: #{posterior_score.1} parent=1 // pred_check_branch
      %759 = sbr.rel (0) target = $region45
    $region44: #{posterior_score.1} parent=1 // pred_region
      _
    $region45: #{posterior_score.1} parent=1 // pred_fallthru
      _
    // Predicated region
    $region46: #{posterior_score.1} parent=1 // pred_check
      _
    $region47: #{posterior_score.1} parent=1 // pred_check_branch
      %761 = sbr.rel (0) target = $region49
    $region48: #{posterior_score.1} parent=1 // pred_region
      _
    $region49: #{posterior_score.1} parent=1 // pred_fallthru
      _
    %762 = vsyncpa [#allocation3], 1

</llo_original>
